<compile_context>
chip_gen: v5e
topology: v5e:2x2
jax: 0.10.0
libtpu: 0.0.40
codegen_flags: <defaults>
</compile_context>

<pallas_src>
import jax
import jax.numpy as jnp
from jax.experimental import pallas as pl
from jax.experimental.pallas import tpu as pltpu


def _round_up(x, m):
    return ((x + m - 1) // m) * m


def _pooler_end_logits_kernel(x1_ref, x2_ref, w0a_ref, w0b_ref, b0_ref,
                              g_ref, beta_ref, w1_ref, b1_ref, o_ref):
    # dense_0 on the two concat halves (no concatenated tensor is materialized):
    #   concat(x1, x2) @ W0^T == x1 @ W0[:, :H1]^T + x2 @ W0[:, H1:]^T
    h = jnp.dot(x1_ref[...], w0a_ref[...], preferred_element_type=jnp.float32)
    h = h + jnp.dot(x2_ref[...], w0b_ref[...], preferred_element_type=jnp.float32)

    # Hoisted (1, H) parameter reads (fp32 locals used once each).
    b0 = b0_ref[...].astype(jnp.float32)
    gamma = g_ref[...].astype(jnp.float32)
    beta = beta_ref[...].astype(jnp.float32)
    b1 = b1_ref[...].astype(jnp.float32)

    # tanh activation (EUP), fp32.
    h = jnp.tanh(h + b0)

    # LayerNorm over last dim (population variance, eps=1e-5), affine, fp32.
    mean = jnp.mean(h, axis=-1, keepdims=True)
    var = jnp.mean(jnp.square(h - mean), axis=-1, keepdims=True)
    hn = (h - mean) * jax.lax.rsqrt(var + 1e-5)
    hn = hn * gamma + beta

    # dense_1 into the lane-dense (padded-to-128) output block.
    out = jnp.dot(hn.astype(w1_ref.dtype), w1_ref[...],
                  preferred_element_type=jnp.float32) + b1
    o_ref[...] = out.astype(o_ref.dtype)


def pooler_end_logits(hidden_states, start_ids, params, *, tm=256):
    """hidden_states: (B, S, H1), start_ids: (B, S, H2), H1 + H2 == hidden_size."""
    w0, b0, gamma, beta, w1, b1 = (params["w0"], params["b0"], params["gamma"],
                                   params["beta"], params["w1"], params["b1"])
    hidden_size = w0.shape[0]
    num_classes = w1.shape[0]

    B, S, H1 = hidden_states.shape
    H2 = start_ids.shape[-1]
    assert H1 + H2 == hidden_size, "concat width must equal hidden_size (module contract)"

    rows = B * S
    x1 = hidden_states.reshape(rows, H1)
    x2 = start_ids.reshape(rows, H2)

    # Tile sizing: big tiles for MXU/pipeline efficiency, but never over-tile
    # tiny inputs; pad the row (token) dimension to a multiple of tm.
    tm = max(8, min(tm, _round_up(rows, 8)))
    rows_p = _round_up(rows, tm)
    if rows_p != rows:
        pad = rows_p - rows
        x1 = jnp.pad(x1, ((0, pad), (0, 0)))
        x2 = jnp.pad(x2, ((0, pad), (0, 0)))

    # Split W0 so no concatenated activation is ever materialized.
    w0a_t = w0[:, :H1].T                       # (H1, H)
    w0b_t = w0[:, H1:].T                       # (H2, H)
    b0_2d = b0.reshape(1, hidden_size)
    g_2d = gamma.reshape(1, hidden_size)
    beta_2d = beta.reshape(1, hidden_size)

    # Lane-dense output: pad num_classes to a multiple of 128 (extra columns
    # are exact zeros and are sliced off below).
    c_pad = _round_up(num_classes, 128)
    w1_t = jnp.zeros((hidden_size, c_pad), w1.dtype).at[:, :num_classes].set(w1.T)
    b1_2d = jnp.zeros((1, c_pad), b1.dtype).at[0, :num_classes].set(b1)

    out_dtype = jnp.result_type(hidden_states.dtype, w0.dtype)

    # Advisory cost estimate for XLA's scheduler.
    flops = 2 * rows_p * hidden_size * hidden_size + 2 * rows_p * hidden_size * c_pad
    bytes_accessed = int(
        x1.size * x1.dtype.itemsize + x2.size * x2.dtype.itemsize
        + w0a_t.size * w0a_t.dtype.itemsize + w0b_t.size * w0b_t.dtype.itemsize
        + w1_t.size * w1_t.dtype.itemsize
        + (b0_2d.size + g_2d.size + beta_2d.size) * b0_2d.dtype.itemsize
        + b1_2d.size * b1_2d.dtype.itemsize
        + rows_p * c_pad * jnp.dtype(out_dtype).itemsize)

    out2d = pl.pallas_call(
        _pooler_end_logits_kernel,
        out_shape=jax.ShapeDtypeStruct((rows_p, c_pad), out_dtype),
        grid_spec=pltpu.PrefetchScalarGridSpec(
            num_scalar_prefetch=0,
            grid=(rows_p // tm,),
            in_specs=[
                pl.BlockSpec((tm, H1), lambda i: (i, 0)),                    # x1 tile
                pl.BlockSpec((tm, H2), lambda i: (i, 0)),                    # x2 tile
                pl.BlockSpec((H1, hidden_size), lambda i: (0, 0)),           # W0a^T
                pl.BlockSpec((H2, hidden_size), lambda i: (0, 0)),           # W0b^T
                pl.BlockSpec((1, hidden_size), lambda i: (0, 0)),            # b0
                pl.BlockSpec((1, hidden_size), lambda i: (0, 0)),            # gamma
                pl.BlockSpec((1, hidden_size), lambda i: (0, 0)),            # beta
                pl.BlockSpec((hidden_size, c_pad), lambda i: (0, 0)),        # W1^T (padded)
                pl.BlockSpec((1, c_pad), lambda i: (0, 0)),                  # b1 (padded)
            ],
            out_specs=pl.BlockSpec((tm, c_pad), lambda i: (i, 0)),
        ),
        compiler_params=pltpu.CompilerParams(
            dimension_semantics=("parallel",),
            vmem_limit_bytes=48 * 1024 * 1024),
        cost_estimate=pl.CostEstimate(
            flops=flops,
            transcendentals=rows_p * hidden_size,
            bytes_accessed=bytes_accessed),
    )(x1, x2, w0a_t, w0b_t, b0_2d, g_2d, beta_2d, w1_t, b1_2d)

    return out2d[:rows, :num_classes].reshape(B, S, num_classes)


def _reference(hidden_states, start_ids, params):
    x = jnp.concatenate([hidden_states, start_ids], axis=-1).astype(jnp.float32)
    x = x @ params["w0"].T + params["b0"]
    x = jnp.tanh(x)
    mean = jnp.mean(x, axis=-1, keepdims=True)
    var = jnp.mean((x - mean) ** 2, axis=-1, keepdims=True)
    x = (x - mean) / jnp.sqrt(var + 1e-5)
    x = x * params["gamma"] + params["beta"]
    return x @ params["w1"].T + params["b1"]


if __name__ == "__main__":
    # Small shapes: batch=2, seq=8, hidden_size=32 (hidden_states dim 24 +
    # start_ids dim 8), num_classes=8.
    B, S = 2, 8
    hidden_size, num_classes = 32, 8
    h1 = hidden_size - num_classes   # hidden_states feature dim
    h2 = num_classes                 # start_ids feature dim (e.g. one-hot labels)

    key = jax.random.PRNGKey(0)
    k = jax.random.split(key, 8)

    hidden_states = jax.random.normal(k[0], (B, S, h1), dtype=jnp.float32)
    start_ids = jax.random.normal(k[1], (B, S, h2), dtype=jnp.float32)

    params = {
        "w0": jax.random.normal(k[2], (hidden_size, hidden_size), jnp.float32) * 0.05,
        "b0": jax.random.normal(k[3], (hidden_size,), jnp.float32) * 0.05,
        "gamma": jnp.ones((hidden_size,), jnp.float32),
        "beta": jnp.zeros((hidden_size,), jnp.float32),
        "w1": jax.random.normal(k[4], (num_classes, hidden_size), jnp.float32) * 0.05,
        "b1": jax.random.normal(k[5], (num_classes,), jnp.float32) * 0.05,
    }

    out = pooler_end_logits(hidden_states, start_ids, params)
    out = jax.block_until_ready(out)

    ref = _reference(hidden_states, start_ids, params)
    assert out.shape == (B, S, num_classes)
    assert jnp.allclose(out, ref, atol=1e-4, rtol=1e-4), "mismatch vs reference"

    print("KERNEL_OK")
</pallas_src>

<mosaic_0001>
module attributes {stable_mosaic.version = 11 : i64} {
  func.func @_pooler_end_logits_kernel(%arg0: i32, %arg1: memref<16x24xf32, #tpu.memory_space<vmem>>, %arg2: memref<16x8xf32, #tpu.memory_space<vmem>>, %arg3: memref<24x32xf32, #tpu.memory_space<vmem>>, %arg4: memref<8x32xf32, #tpu.memory_space<vmem>>, %arg5: memref<1x32xf32, #tpu.memory_space<vmem>>, %arg6: memref<1x32xf32, #tpu.memory_space<vmem>>, %arg7: memref<1x32xf32, #tpu.memory_space<vmem>>, %arg8: memref<32x128xf32, #tpu.memory_space<vmem>>, %arg9: memref<1x128xf32, #tpu.memory_space<vmem>>, %arg10: memref<16x128xf32, #tpu.memory_space<vmem>>) attributes {dimension_semantics = [#tpu.dimension_semantics<parallel>], iteration_bounds = array<i64: 1>, scalar_prefetch = 0 : i64, scratch_operands = 0 : i64, tpu.core_type = #tpu.core_type<tc>, window_params = [{transform_indices = @transform_0, window_bounds = array<i64: 16, 24>}, {transform_indices = @transform_1, window_bounds = array<i64: 16, 8>}, {pipeline_mode = #tpu.pipeline_mode<synchronous>, transform_indices = @transform_2, window_bounds = array<i64: 24, 32>}, {pipeline_mode = #tpu.pipeline_mode<synchronous>, transform_indices = @transform_3, window_bounds = array<i64: 8, 32>}, {pipeline_mode = #tpu.pipeline_mode<synchronous>, transform_indices = @transform_4, window_bounds = array<i64: 1, 32>}, {pipeline_mode = #tpu.pipeline_mode<synchronous>, transform_indices = @transform_5, window_bounds = array<i64: 1, 32>}, {pipeline_mode = #tpu.pipeline_mode<synchronous>, transform_indices = @transform_6, window_bounds = array<i64: 1, 32>}, {pipeline_mode = #tpu.pipeline_mode<synchronous>, transform_indices = @transform_7, window_bounds = array<i64: 32, 128>}, {pipeline_mode = #tpu.pipeline_mode<synchronous>, transform_indices = @transform_8, window_bounds = array<i64: 1, 128>}, {transform_indices = @transform_9, window_bounds = array<i64: 16, 128>}]} {
    %c0 = arith.constant 0 : index
    %c0_0 = arith.constant 0 : index
    %0 = vector.load %arg1[%c0, %c0_0] : memref<16x24xf32, #tpu.memory_space<vmem>>, vector<16x24xf32>
    %c0_1 = arith.constant 0 : index
    %c0_2 = arith.constant 0 : index
    %1 = vector.load %arg3[%c0_1, %c0_2] : memref<24x32xf32, #tpu.memory_space<vmem>>, vector<24x32xf32>
    %cst = arith.constant dense<0.000000e+00> : vector<16x32xf32>
    %2 = tpu.matmul %0, %1, %cst {dimension_numbers = #tpu.dot_dimension_numbers<[1], [0], [0], [1], [0, 0, 1, 1], [], []>} : vector<16x24xf32>, vector<24x32xf32>, vector<16x32xf32> -> vector<16x32xf32>
    %c0_3 = arith.constant 0 : index
    %c0_4 = arith.constant 0 : index
    %3 = vector.load %arg2[%c0_3, %c0_4] : memref<16x8xf32, #tpu.memory_space<vmem>>, vector<16x8xf32>
    %c0_5 = arith.constant 0 : index
    %c0_6 = arith.constant 0 : index
    %4 = vector.load %arg4[%c0_5, %c0_6] : memref<8x32xf32, #tpu.memory_space<vmem>>, vector<8x32xf32>
    %cst_7 = arith.constant dense<0.000000e+00> : vector<16x32xf32>
    %5 = tpu.matmul %3, %4, %cst_7 {dimension_numbers = #tpu.dot_dimension_numbers<[1], [0], [0], [1], [0, 0, 1, 1], [], []>} : vector<16x8xf32>, vector<8x32xf32>, vector<16x32xf32> -> vector<16x32xf32>
    %6 = arith.addf %2, %5 : vector<16x32xf32>
    %c0_8 = arith.constant 0 : index
    %c0_9 = arith.constant 0 : index
    %7 = vector.load %arg5[%c0_8, %c0_9] : memref<1x32xf32, #tpu.memory_space<vmem>>, vector<1x32xf32>
    %c0_10 = arith.constant 0 : index
    %c0_11 = arith.constant 0 : index
    %8 = vector.load %arg6[%c0_10, %c0_11] : memref<1x32xf32, #tpu.memory_space<vmem>>, vector<1x32xf32>
    %c0_12 = arith.constant 0 : index
    %c0_13 = arith.constant 0 : index
    %9 = vector.load %arg7[%c0_12, %c0_13] : memref<1x32xf32, #tpu.memory_space<vmem>>, vector<1x32xf32>
    %c0_14 = arith.constant 0 : index
    %c0_15 = arith.constant 0 : index
    %10 = vector.load %arg9[%c0_14, %c0_15] : memref<1x128xf32, #tpu.memory_space<vmem>>, vector<1x128xf32>
    %11 = vector.broadcast %7 : vector<1x32xf32> to vector<16x32xf32>
    %12 = arith.addf %6, %11 : vector<16x32xf32>
    %13 = math.tanh %12 : vector<16x32xf32>
    %cst_16 = arith.constant dense<0.000000e+00> : vector<16xf32>
    %14 = vector.multi_reduction <add>, %13, %cst_16 [1] : vector<16x32xf32> to vector<16xf32>
    %15 = vector.shape_cast %14 : vector<16xf32> to vector<16x1xf32>
    %cst_17 = arith.constant 3.200000e+01 : f32
    %16 = vector.broadcast %cst_17 : f32 to vector<16x1xf32>
    %17 = arith.divf %15, %16 : vector<16x1xf32>
    %18 = vector.broadcast %17 : vector<16x1xf32> to vector<16x32xf32>
    %19 = arith.subf %13, %18 : vector<16x32xf32>
    %20 = arith.mulf %19, %19 : vector<16x32xf32>
    %cst_18 = arith.constant dense<0.000000e+00> : vector<16xf32>
    %21 = vector.multi_reduction <add>, %20, %cst_18 [1] : vector<16x32xf32> to vector<16xf32>
    %22 = vector.shape_cast %21 : vector<16xf32> to vector<16x1xf32>
    %cst_19 = arith.constant 3.200000e+01 : f32
    %23 = vector.broadcast %cst_19 : f32 to vector<16x1xf32>
    %24 = arith.divf %22, %23 : vector<16x1xf32>
    %25 = vector.broadcast %17 : vector<16x1xf32> to vector<16x32xf32>
    %26 = arith.subf %13, %25 : vector<16x32xf32>
    %cst_20 = arith.constant 9.99999974E-6 : f32
    %27 = vector.broadcast %cst_20 : f32 to vector<16x1xf32>
    %28 = arith.addf %24, %27 : vector<16x1xf32>
    %29 = math.rsqrt %28 : vector<16x1xf32>
    %30 = vector.broadcast %29 : vector<16x1xf32> to vector<16x32xf32>
    %31 = arith.mulf %26, %30 : vector<16x32xf32>
    %32 = vector.broadcast %8 : vector<1x32xf32> to vector<16x32xf32>
    %33 = arith.mulf %31, %32 : vector<16x32xf32>
    %34 = vector.broadcast %9 : vector<1x32xf32> to vector<16x32xf32>
    %35 = arith.addf %33, %34 : vector<16x32xf32>
    %c0_21 = arith.constant 0 : index
    %c0_22 = arith.constant 0 : index
    %36 = vector.load %arg8[%c0_21, %c0_22] : memref<32x128xf32, #tpu.memory_space<vmem>>, vector<32x128xf32>
    %cst_23 = arith.constant dense<0.000000e+00> : vector<16x128xf32>
    %37 = tpu.matmul %35, %36, %cst_23 {dimension_numbers = #tpu.dot_dimension_numbers<[1], [0], [0], [1], [0, 0, 1, 1], [], []>} : vector<16x32xf32>, vector<32x128xf32>, vector<16x128xf32> -> vector<16x128xf32>
    %38 = vector.broadcast %10 : vector<1x128xf32> to vector<16x128xf32>
    %39 = arith.addf %37, %38 : vector<16x128xf32>
    %c0_24 = arith.constant 0 : index
    %c0_25 = arith.constant 0 : index
    %40 = vector.load %arg10[%c0_24, %c0_25] : memref<16x128xf32, #tpu.memory_space<vmem>>, vector<16x128xf32>
    tpu.vector_store %arg10[%c0_24, %c0_25], %39 {strides = array<i32>} : memref<16x128xf32, #tpu.memory_space<vmem>>, vector<16x128xf32>,
    return
  }
  func.func @transform_0(%arg0: i32) -> (i32, i32) {
    %c0_i32 = arith.constant 0 : i32
    %c0_i32_0 = arith.constant 0 : i32
    return %arg0, %c0_i32 : i32, i32
  }
  func.func @transform_1(%arg0: i32) -> (i32, i32) {
    %c0_i32 = arith.constant 0 : i32
    %c0_i32_0 = arith.constant 0 : i32
    return %arg0, %c0_i32 : i32, i32
  }
  func.func @transform_2(%arg0: i32) -> (i32, i32) {
    %c0_i32 = arith.constant 0 : i32
    %c0_i32_0 = arith.constant 0 : i32
    %c0_i32_1 = arith.constant 0 : i32
    return %c0_i32, %c0_i32_0 : i32, i32
  }
  func.func @transform_3(%arg0: i32) -> (i32, i32) {
    %c0_i32 = arith.constant 0 : i32
    %c0_i32_0 = arith.constant 0 : i32
    %c0_i32_1 = arith.constant 0 : i32
    return %c0_i32, %c0_i32_0 : i32, i32
  }
  func.func @transform_4(%arg0: i32) -> (i32, i32) {
    %c0_i32 = arith.constant 0 : i32
    %c0_i32_0 = arith.constant 0 : i32
    %c0_i32_1 = arith.constant 0 : i32
    return %c0_i32, %c0_i32_0 : i32, i32
  }
  func.func @transform_5(%arg0: i32) -> (i32, i32) {
    %c0_i32 = arith.constant 0 : i32
    %c0_i32_0 = arith.constant 0 : i32
    %c0_i32_1 = arith.constant 0 : i32
    return %c0_i32, %c0_i32_0 : i32, i32
  }
  func.func @transform_6(%arg0: i32) -> (i32, i32) {
    %c0_i32 = arith.constant 0 : i32
    %c0_i32_0 = arith.constant 0 : i32
    %c0_i32_1 = arith.constant 0 : i32
    return %c0_i32, %c0_i32_0 : i32, i32
  }
  func.func @transform_7(%arg0: i32) -> (i32, i32) {
    %c0_i32 = arith.constant 0 : i32
    %c0_i32_0 = arith.constant 0 : i32
    %c0_i32_1 = arith.constant 0 : i32
    return %c0_i32, %c0_i32_0 : i32, i32
  }
  func.func @transform_8(%arg0: i32) -> (i32, i32) {
    %c0_i32 = arith.constant 0 : i32
    %c0_i32_0 = arith.constant 0 : i32
    %c0_i32_1 = arith.constant 0 : i32
    return %c0_i32, %c0_i32_0 : i32, i32
  }
  func.func @transform_9(%arg0: i32) -> (i32, i32) {
    %c0_i32 = arith.constant 0 : i32
    %c0_i32_0 = arith.constant 0 : i32
    return %arg0, %c0_i32 : i32, i32
  }
}

</mosaic_0001>

<llo_original>
// kernel: tpu_custom_call.1
$region0: #{tpu_custom_call.1}
  #allocation0 [shape = 'u32[]', space=smem, size = 0x4, offset = 0x4, fixed_abs, tag = 'smem constant byte address 0x4 - core index']
  #allocation1 [shape = 'u32[72,128]{1,0:T(1,128)}', space=vmem, size = 0x9000, scoped, tag = 'internal scratch']
  %s0 = inlined_call_operand.hbm [shape: f32[16,24], index: 0, kind: input, shape index: {}]
  %s1 = inlined_call_operand.vmem [shape: f32[16,8], index: 1, kind: input, shape index: {}]
  %s2 = inlined_call_operand.vmem [shape: f32[24,32], index: 2, kind: input, shape index: {}]
  %s3 = inlined_call_operand.hbm [shape: f32[8,32], index: 3, kind: input, shape index: {}]
  %s4 = inlined_call_operand.vmem [shape: f32[1,32], index: 4, kind: input, shape index: {}]
  %s5 = inlined_call_operand.vmem [shape: f32[1,32], index: 5, kind: input, shape index: {}]
  %s6 = inlined_call_operand.vmem [shape: f32[1,32], index: 6, kind: input, shape index: {}]
  %s7 = inlined_call_operand.hbm [shape: f32[32,128], index: 7, kind: input, shape index: {}]
  %s8 = inlined_call_operand.vmem [shape: f32[1,128], index: 8, kind: input, shape index: {}]
  %s9 = inlined_call_operand.hbm [shape: f32[16,128], index: 9, kind: output, shape index: {}]
  %s10 = sld [smem:[#allocation0]]
  $region58: #{tpu_custom_call.1} parent=0
    _
  %s12 = ssub.s32 1, %s10
  %s13 = scalar_select 0, %s12, %s10
  $region1: #{tpu_custom_call.1} parent=0
    #allocation2 [shape = 'u8[8192]{0}', space=vmem, size = 0x2000, scoped, tag = 'input window, operand 0, single buffered']
    #allocation3 [shape = 's32[1]{0}', space=sflag, size = 0x4, scoped, tag = 'scoped memory for tpu_custom_call.1']
    #allocation4 [shape = 's32[1]{0}', space=sflag, size = 0x4, scoped, tag = 'scoped memory for tpu_custom_call.1']
    #allocation5 [shape = 'u8[4096]{0}', space=vmem, size = 0x1000, scoped, tag = 'input window, operand 3, single buffered']
    #allocation6 [shape = 's32[1]{0}', space=sflag, size = 0x4, scoped, tag = 'scoped memory for tpu_custom_call.1']
    #allocation7 [shape = 'u8[16384]{0}', space=vmem, size = 0x4000, scoped, tag = 'input window, operand 7, single buffered']
    #allocation8 [shape = 'u8[8192]{0}', space=vmem, size = 0x2000, scoped, tag = 'output window, operand 0, single buffered']
    %14 = vsyncpa [#allocation3], 0
    %15 = vsyncpa [#allocation6], 0
    %16 = vsyncpa [#allocation4], 0
    // Predicated region
    $region2: #{tpu_custom_call.1} parent=1 // pred_check
      _
    $region3: #{tpu_custom_call.1} parent=1 // pred_check_branch
      %18 = sbr.rel (0) target = $region5
    $region4: #{tpu_custom_call.1} parent=1 // pred_region
      %20 = vsyncadd [#allocation3], 0
      %s21 = sshll.u32 %s0, 4
      %s22 = int_to_ptr.hbm [resolvable:$true] %s21
      %s23 = sshll.u32 [#allocation2], 4
      %s24 = int_to_ptr.vmem [resolvable:$true] %s23
      %29 = dma.hbm_to_vmem [thread:$0]  %s22, 256, %s24, [#allocation3], 128, 128, 8
    $region5: #{tpu_custom_call.1} parent=1 // pred_fallthru
      _
    // Predicated region
    $region6: #{tpu_custom_call.1} parent=1 // pred_check
      _
    $region7: #{tpu_custom_call.1} parent=1 // pred_check_branch
      %31 = sbr.rel (0) target = $region9
    $region8: #{tpu_custom_call.1} parent=1 // pred_region
      _
    $region9: #{tpu_custom_call.1} parent=1 // pred_fallthru
      _
    // Predicated region
    $region10: #{tpu_custom_call.1} parent=1 // pred_check
      _
    $region11: #{tpu_custom_call.1} parent=1 // pred_check_branch
      %33 = sbr.rel (0) target = $region13
    $region12: #{tpu_custom_call.1} parent=1 // pred_region
      _
    $region13: #{tpu_custom_call.1} parent=1 // pred_fallthru
      _
    // Predicated region
    $region14: #{tpu_custom_call.1} parent=1 // pred_check
      _
    $region15: #{tpu_custom_call.1} parent=1 // pred_check_branch
      %35 = sbr.rel (0) target = $region17
    $region16: #{tpu_custom_call.1} parent=1 // pred_region
      %37 = vsyncadd [#allocation6], 0
      %s39 = sshll.u32 %s3, 4
      %s40 = int_to_ptr.hbm [resolvable:$true] %s39
      %s41 = sshll.u32 [#allocation5], 4
      %s42 = int_to_ptr.vmem [resolvable:$true] %s41
      %44 = dma.hbm_to_vmem [thread:$0]  %s40, 128, %s42, [#allocation6]
    $region17: #{tpu_custom_call.1} parent=1 // pred_fallthru
      _
    // Predicated region
    $region18: #{tpu_custom_call.1} parent=1 // pred_check
      _
    $region19: #{tpu_custom_call.1} parent=1 // pred_check_branch
      %46 = sbr.rel (0) target = $region21
    $region20: #{tpu_custom_call.1} parent=1 // pred_region
      _
    $region21: #{tpu_custom_call.1} parent=1 // pred_fallthru
      _
    // Predicated region
    $region22: #{tpu_custom_call.1} parent=1 // pred_check
      _
    $region23: #{tpu_custom_call.1} parent=1 // pred_check_branch
      %48 = sbr.rel (0) target = $region25
    $region24: #{tpu_custom_call.1} parent=1 // pred_region
      _
    $region25: #{tpu_custom_call.1} parent=1 // pred_fallthru
      _
    // Predicated region
    $region26: #{tpu_custom_call.1} parent=1 // pred_check
      _
    $region27: #{tpu_custom_call.1} parent=1 // pred_check_branch
      %50 = sbr.rel (0) target = $region29
    $region28: #{tpu_custom_call.1} parent=1 // pred_region
      _
    $region29: #{tpu_custom_call.1} parent=1 // pred_fallthru
      _
    // Predicated region
    $region30: #{tpu_custom_call.1} parent=1 // pred_check
      _
    $region31: #{tpu_custom_call.1} parent=1 // pred_check_branch
      %52 = sbr.rel (0) target = $region33
    $region32: #{tpu_custom_call.1} parent=1 // pred_region
      %54 = vsyncadd [#allocation6], 0
      %s55 = sshll.u32 %s7, 4
      %s56 = int_to_ptr.hbm [resolvable:$true] %s55
      %s57 = sshll.u32 [#allocation7], 4
      %s58 = int_to_ptr.vmem [resolvable:$true] %s57
      %63 = dma.hbm_to_vmem [thread:$0]  %s56, 512, %s58, [#allocation6], 128, 128, 8
    $region33: #{tpu_custom_call.1} parent=1 // pred_fallthru
      _
    // Predicated region
    $region34: #{tpu_custom_call.1} parent=1 // pred_check
      _
    $region35: #{tpu_custom_call.1} parent=1 // pred_check_branch
      %65 = sbr.rel (0) target = $region37
    $region36: #{tpu_custom_call.1} parent=1 // pred_region
      _
    $region37: #{tpu_custom_call.1} parent=1 // pred_fallthru
      _
    // Predicated region
    $region38: #{tpu_custom_call.1} parent=1 // pred_check
      _
    $region39: #{tpu_custom_call.1} parent=1 // pred_check_branch
      %67 = sbr.rel (0) target = $region41
    $region40: #{tpu_custom_call.1} parent=1 // pred_region
      %69 = dma.done [#allocation3], 256
    $region41: #{tpu_custom_call.1} parent=1 // pred_fallthru
      _
    // Predicated region
    $region42: #{tpu_custom_call.1} parent=1 // pred_check
      _
    $region43: #{tpu_custom_call.1} parent=1 // pred_check_branch
      %71 = sbr.rel (0) target = $region45
    $region44: #{tpu_custom_call.1} parent=1 // pred_region
      %73 = dma.done [#allocation6], 128
    $region45: #{tpu_custom_call.1} parent=1 // pred_fallthru
      _
    // Predicated region
    $region46: #{tpu_custom_call.1} parent=1 // pred_check
      _
    $region47: #{tpu_custom_call.1} parent=1 // pred_check_branch
      %75 = sbr.rel (0) target = $region49
    $region48: #{tpu_custom_call.1} parent=1 // pred_region
      %77 = dma.done [#allocation6], 512
    $region49: #{tpu_custom_call.1} parent=1 // pred_fallthru
      _
    %v78 = vld [vmem:[#allocation2] sm:$0xff]
    %v79 = vld [vmem:[#allocation2 + $0x8] sm:$0xff]
    %v80 = vld [vmem:[%s2] sm:$0xff]
    %v81 = vld [vmem:[%s2 + $0x8] sm:$0xff]
    %v82 = vld [vmem:[%s2 + $0x10] sm:$0xff]
    %v83 = vld [vmem:[%s1] sm:$0xff]
    %v84 = vld [vmem:[%s1 + $0x8] sm:$0xff]
    %v85 = vld [vmem:[#allocation5] sm:$0xff]
    %vm86 = vcmask 64512
    %v88 = vsel %vm86, %v83, 0
    %v91 = vsel %vm86, %v84, 0
    %93 = vmatpush.msra.mxu0 0.0
    %94 = vmatpush.msra.mxu0 0.0
    %95 = vmatpush.msra.mxu0 0.0
    %96 = vmatpush.msra.mxu0 0.0
    %97 = vmatpush.msra.mxu0 0.0
    %98 = vmatpush.msra.mxu0 0.0
    %99 = vmatpush.msra.mxu0 0.0
    %100 = vmatpush.msra.mxu0 0.0
    %101 = vmatpush.msra.mxu0 0.0
    %102 = vmatpush.msra.mxu0 0.0
    %103 = vmatpush.msra.mxu0 0.0
    %104 = vmatpush.msra.mxu0 0.0
    %105 = vmatpush.msra.mxu0 0.0
    %106 = vmatpush.msra.mxu0 0.0
    %107 = vmatpush.msra.mxu0 0.0
    %108 = vmatpush.msra.mxu0 %v85
    %109 = vmatmul.f32.gmra.mxu0 %v88
    %v110 = vpop.f32.mrf.mxu0
    %v111 = vadd.f32 0.0, %v110
    %112 = vmatmul.f32.gmra.mxu0 %v91
    %v113 = vpop.f32.mrf.mxu0
    %v114 = vadd.f32 0.0, %v113
    %115 = vdwg.mxu0
    %vm116 = vcmask 195584
    %v118 = vsel %vm116, %v78, 0
    %v121 = vsel %vm116, %v79, 0
    %123 = vmatpush.msra.mxu0 0.0
    %124 = vmatpush.msra.mxu0 0.0
    %125 = vmatpush.msra.mxu0 0.0
    %126 = vmatpush.msra.mxu0 0.0
    %127 = vmatpush.msra.mxu0 0.0
    %128 = vmatpush.msra.mxu0 0.0
    %129 = vmatpush.msra.mxu0 0.0
    %130 = vmatpush.msra.mxu0 0.0
    %131 = vmatpush.msra.mxu0 0.0
    %132 = vmatpush.msra.mxu0 0.0
    %133 = vmatpush.msra.mxu0 0.0
    %134 = vmatpush.msra.mxu0 0.0
    %135 = vmatpush.msra.mxu0 0.0
    %136 = vmatpush.msra.mxu0 %v82
    %137 = vmatpush.msra.mxu0 %v81
    %138 = vmatpush.msra.mxu0 %v80
    %139 = vmatmul.f32.gmra.mxu0 %v118
    %v140 = vpop.f32.mrf.mxu0
    %v141 = vadd.f32 %v111, %v140
    %142 = vmatmul.f32.gmra.mxu0 %v121
    %v143 = vpop.f32.mrf.mxu0
    %v144 = vadd.f32 %v114, %v143
    %145 = vdwg.mxu0
    %v146 = vld [vmem:[%s4] sm:$0x1]
    %v147 = vld [vmem:[%s5] sm:$0x1]
    %v148 = vld [vmem:[%s6] sm:$0x1]
    %v149 = vld [vmem:[%s8] sm:$0x1]
    %v151 = vperm.slane %v146, 0
    %v153 = vadd.f32 %v141, %v151
    %v154 = vadd.f32 %v144, %v151
    %v155 = vtanh.pop %v153
    %v156 = vtanh.pop %v154
    %vm157 = vcmask 261120
    %v158 = vsel %vm157, %v155, 0.0
    %159 = vadd.xlane.f32.xlu0 %v158
    %v160 = vpop.xlane.xlu0 %159
    %v161 = vsel %vm157, %v156, 0.0
    %162 = vadd.xlane.f32.xlu0 %v161
    %v163 = vpop.xlane.xlu0 %162
    %v164 = vrcp.pop 32.0
    %v165 = vmul.f32 32.0, %v164
    %v166 = vsub.f32 1.0, %v165
    %v167 = vmul.f32 %v164, %v166
    %v168 = vadd.f32 %v164, %v167
    %vm169 = vweird.f32 %v164
    %v170 = vsel %vm169, %v164, %v168
    %v171 = vmul.f32 %v160, %v170
    %v172 = vmul.f32 %v163, %v170
    %v173 = vsub.f32 %v155, %v171
    %v174 = vsub.f32 %v156, %v172
    %v175 = vmul.f32 %v173, %v173
    %v176 = vmul.f32 %v174, %v174
    %v177 = vsel %vm157, %v175, 0.0
    %178 = vadd.xlane.f32.xlu0 %v177
    %v179 = vpop.xlane.xlu0 %178
    %v180 = vsel %vm157, %v176, 0.0
    %181 = vadd.xlane.f32.xlu0 %v180
    %v182 = vpop.xlane.xlu0 %181
    %v183 = vmul.f32 %v179, %v170
    %v184 = vmul.f32 %v182, %v170
    %v185 = vadd.f32 %v183, 1e-05
    %v186 = vadd.f32 %v184, 1e-05
    %v187 = vrsqrt.pop %v185
    %v188 = vmul.f32 %v187, %v185
    %v189 = vmul.f32 %v188, %v187
    %v190 = vmul.f32 0.5, %v189
    %v191 = vsub.f32 1.5, %v190
    %v192 = vmul.f32 %v187, %v191
    %vm193 = vweird.f32 %v185
    %vm194 = vweird.f32 %v187
    %vm195 = vmor %vm193, %vm194
    %v196 = vsel %vm195, %v187, %v192
    %v197 = vrsqrt.pop %v186
    %v198 = vmul.f32 %v197, %v186
    %v199 = vmul.f32 %v198, %v197
    %v200 = vmul.f32 0.5, %v199
    %v201 = vsub.f32 1.5, %v200
    %v202 = vmul.f32 %v197, %v201
    %vm203 = vweird.f32 %v186
    %vm204 = vweird.f32 %v197
    %vm205 = vmor %vm203, %vm204
    %v206 = vsel %vm205, %v197, %v202
    %v207 = vmul.f32 %v173, %v196
    %v208 = vmul.f32 %v174, %v206
    %v210 = vperm.slane %v147, 0
    %v212 = vmul.f32 %v207, %v210
    %v213 = vmul.f32 %v208, %v210
    %v215 = vperm.slane %v148, 0
    %v217 = vadd.f32 %v212, %v215
    %v218 = vadd.f32 %v213, %v215
    %v219 = vld [vmem:[#allocation7] sm:$0xff]
    %v220 = vld [vmem:[#allocation7 + $0x8] sm:$0xff]
    %v221 = vld [vmem:[#allocation7 + $0x10] sm:$0xff]
    %v222 = vld [vmem:[#allocation7 + $0x18] sm:$0xff]
    %v224 = vperm.slane %v149, 0
    %v227 = vsel %vm157, %v217, 0
    %v230 = vsel %vm157, %v218, 0
    %232 = vmatpush.msra.mxu0 0.0
    %233 = vmatpush.msra.mxu0 0.0
    %234 = vmatpush.msra.mxu0 0.0
    %235 = vmatpush.msra.mxu0 0.0
    %236 = vmatpush.msra.mxu0 0.0
    %237 = vmatpush.msra.mxu0 0.0
    %238 = vmatpush.msra.mxu0 0.0
    %239 = vmatpush.msra.mxu0 0.0
    %240 = vmatpush.msra.mxu0 0.0
    %241 = vmatpush.msra.mxu0 0.0
    %242 = vmatpush.msra.mxu0 0.0
    %243 = vmatpush.msra.mxu0 0.0
    %244 = vmatpush.msra.mxu0 %v222
    %245 = vmatpush.msra.mxu0 %v221
    %246 = vmatpush.msra.mxu0 %v220
    %247 = vmatpush.msra.mxu0 %v219
    %248 = vmatmul.f32.gmra.mxu0 %v227
    %v249 = vpop.f32.mrf.mxu0
    %v250 = vadd.f32 %v224, %v249
    %251 = vmatmul.f32.gmra.mxu0 %v230
    %v252 = vpop.f32.mrf.mxu0
    %v253 = vadd.f32 %v224, %v252
    %254 = vdwg.mxu0
    %255 = vst [vmem:[#allocation8] sm:$0xff] %v250
    %256 = vst [vmem:[#allocation8 + $0x8] sm:$0xff] %v253
    // Predicated region
    $region50: #{tpu_custom_call.1} parent=1 // pred_check
      _
    $region51: #{tpu_custom_call.1} parent=1 // pred_check_branch
      %258 = sbr.rel (0) target = $region53
    $region52: #{tpu_custom_call.1} parent=1 // pred_region
      %260 = vsyncadd [#allocation4], 0
      %s261 = sshll.u32 [#allocation8], 4
      %s262 = int_to_ptr.vmem [resolvable:$true] %s261
      %s263 = sshll.u32 %s9, 4
      %s264 = int_to_ptr.hbm [resolvable:$true] %s263
      %269 = dma.vmem_to_hbm [thread:$0]  %s262, 256, %s264, [#allocation4], 128, 128, 8
    $region53: #{tpu_custom_call.1} parent=1 // pred_fallthru
      _
    // Predicated region
    $region54: #{tpu_custom_call.1} parent=1 // pred_check
      _
    $region55: #{tpu_custom_call.1} parent=1 // pred_check_branch
      %271 = sbr.rel (0) target = $region57
    $region56: #{tpu_custom_call.1} parent=1 // pred_region
      %273 = dma.done [#allocation4], 256
    $region57: #{tpu_custom_call.1} parent=1 // pred_fallthru
      _
    %274 = vsyncpa [#allocation3], 1
    %275 = vsyncpa [#allocation6], 1
    %276 = vsyncpa [#allocation4], 1

</llo_original>
